<compile_context>
chip_gen: v6e
topology: v6e:2x2x1
jax: 0.10.0
libtpu: 0.0.40
codegen_flags: <defaults>
</compile_context>

<pallas_src>
import functools

import jax
import jax.numpy as jnp
from jax.experimental import pallas as pl
from jax.experimental.pallas import tpu as pltpu


def _tpu_vmem_and_cores():
    """Best-effort per-core VMEM capacity and TensorCore count."""
    vmem_cap = 64 * 1024 * 1024          # conservative (v7x-sized) default
    cores = 1                            # single-TC default (v5e / v6e)
    try:
        info = pltpu.get_tpu_info()
        v = getattr(info, "vmem_capacity_bytes", None)
        if isinstance(v, int) and v > 0:
            vmem_cap = v
        for name in ("num_cores", "num_tensorcores", "tensorcores_per_chip", "core_count"):
            c = getattr(info, name, None)
            if isinstance(c, int) and 1 <= c <= 16:
                cores = c
                break
    except Exception:
        pass
    if cores == 1:
        try:
            kind = jax.devices()[0].device_kind.lower()
            if "v7" in kind or "tpu7" in kind or "v4" in kind:
                cores = 2                # 2 TensorCores per chip
        except Exception:
            pass
    return vmem_cap, cores


def _tv_kernel(x_ref, acc_ref, *, th, h_valid, w_orig, y_scale, x_scale, row_guard):
    """Fold one (P, TH, Wp) block of packed planes into the per-shard TV partial.

    x_ref:   (P, TH, Wp) lane-packed, zero-padded image planes.
    acc_ref: (1, 1, Wp)  resident per-shard accumulator (pre-scaled partial sums).
    """
    first = jnp.logical_and(pl.program_id(1) == 0, pl.program_id(2) == 0)

    @pl.when(first)
    def _init():
        acc_ref[...] = jnp.zeros_like(acc_ref)

    x = x_ref[...].astype(jnp.float32)
    wp = x.shape[-1]

    # --- vertical neighbours: rolled[i] = x[i-1] (sublane rotate on the XLU) ---
    row = jax.lax.broadcasted_iota(jnp.int32, x.shape, 1)
    y_mask = row > 0                                   # local row 0 holds the block wrap
    if row_guard:                                      # zero-padded rows exist below H
        g_row = pl.program_id(2) * th + row            # global row in the padded plane
        y_mask = jnp.logical_and(y_mask, g_row < h_valid)
    y_term = jnp.where(y_mask, jnp.abs(x - pltpu.roll(x, shift=1, axis=1)), 0.0)

    # --- horizontal neighbours: rolled[j] = x[j-1] (lane rotate on the XLU) ---
    lane = jax.lax.broadcasted_iota(jnp.int32, x.shape, 2)
    if wp == w_orig:                                   # no packing / no lane padding
        x_mask = lane > 0                              # only the wrap column
    else:                                              # plane seams, pad seam and wrap
        x_mask = (lane % w_orig) != 0
    x_term = jnp.where(x_mask, jnp.abs(x - pltpu.roll(x, shift=1, axis=2)), 0.0)

    if y_scale == 1.0 and x_scale == 1.0:              # 'sum'
        contrib = y_term + x_term
    else:                                              # 'mean': fold denominators in
        contrib = jnp.float32(y_scale) * y_term + jnp.float32(x_scale) * x_term

    # Two cheap folds (VPU over the plane axis, XLU over sublanes) leave a single
    # lane-resident row; the only full cross-lane reduction happens once, in the
    # wrapper, on the tiny (S, 1, Wp) partials.
    col = jnp.sum(contrib, axis=0)                     # (TH, Wp)
    acc_ref[...] += jnp.sum(col, axis=0, keepdims=True)[None]


def weighted_tv_loss(pred, weight=None, loss_weight=1.0, reduction='mean',
                     num_shards=None, max_block_bytes=None):
    """basicsr WeightedTVLoss.forward (weight=None path). pred: (N, C, H, W)."""
    if reduction not in ('mean', 'sum'):
        raise ValueError(
            f'Unsupported reduction mode: {reduction}. Supported ones are: mean | sum')
    if weight is not None:
        # TODO(synk): element-wise `weight` path of basicsr's weighted l1_loss
        # (weight_reduce_loss) is not implemented.
        raise NotImplementedError('element-wise weight is not supported')

    N, C, H, W = pred.shape
    if H < 2 or W < 2:
        raise ValueError('WeightedTVLoss requires H >= 2 and W >= 2')

    nc = N * C
    planes = pred.reshape(nc, H, W)
    vmem_cap, cores = _tpu_vmem_and_cores()
    S = int(num_shards) if num_shards is not None else max(1, cores)

    # --- lane packing: put k small-W planes side by side along the 128 lanes ---
    k = max(1, min(128 // W, nc)) if W < 128 else 1
    if k > 1:
        gpad = (-nc) % k
        if gpad:
            planes = jnp.concatenate(
                [planes, jnp.zeros((gpad, H, W), planes.dtype)], axis=0)
        G = planes.shape[0] // k
        packed = planes.reshape(G, k, H, W).transpose(0, 2, 1, 3).reshape(G, H, k * W)
    else:
        G, packed = nc, planes
    # TODO(synk): for W >= 128 with W % 128 != 0 the lane padding below trades a
    # little extra HBM traffic for fully aligned rolls; a column-tiled variant
    # could avoid the padded copy.
    Wp = -(-(k * W) // 128) * 128            # lane-dense, 128-aligned packed width

    # --- block sizing ----------------------------------------------------------
    itemsize = packed.dtype.itemsize
    if max_block_bytes is not None:
        target = int(max_block_bytes)
    elif vmem_cap >= 100 * 1024 * 1024:      # 128 MiB VMEM parts (v5e / v6e)
        target = 4 * 1024 * 1024
    else:                                    # 64 MiB VMEM (v7x)
        target = 2 * 1024 * 1024

    H8 = -(-H // 8) * 8
    row_bytes = Wp * itemsize
    if H8 * row_bytes <= target:             # whole (8-aligned) plane per block
        TH, n_h = H8, 1
    else:                                    # tile H; boundary diffs fixed up below
        TH = max(8, (target // row_bytes) // 8 * 8)
        n_h = -(-H // TH)
    Hp = n_h * TH

    pps = -(-G // S)                                        # plane-groups per shard
    P = max(1, min(pps, max(1, target // (TH * row_bytes))))
    nblk = -(-pps // P)
    P = -(-pps // nblk)                                     # bound zero-plane padding
    Gp = S * nblk * P

    pads = ((0, Gp - G), (0, Hp - H), (0, Wp - k * W))
    if any(amount for _, amount in pads):
        packed = jnp.pad(packed, pads)                      # zero padding is exact

    y_count = nc * (H - 1) * W
    x_count = nc * H * (W - 1)
    y_scale = 1.0 / y_count if reduction == 'mean' else 1.0
    x_scale = 1.0 / x_count if reduction == 'mean' else 1.0

    kernel = functools.partial(
        _tv_kernel, th=TH, h_valid=H, w_orig=W,
        y_scale=y_scale, x_scale=x_scale, row_guard=(Hp != H))

    in_map = lambda c, i, h: (c * nblk + i, h, 0)
    in_spec = pl.BlockSpec((P, TH, Wp), in_map)
    n_buf = 2
    if nblk * n_h >= 3:
        try:  # 3-deep input pipeline hides DMA issue latency on short blocks
            in_spec = pl.BlockSpec((P, TH, Wp), in_map, pipeline_mode=pl.Buffered(3))
            n_buf = 3
        except Exception:
            pass

    block_elems = P * TH * Wp
    vmem_limit = int(min(
        max(n_buf * block_elems * itemsize        # pipelined input buffers
            + 8 * block_elems * 4                 # f32 temporaries in the body
            + 8 * Wp * 4                          # resident accumulator
            + (2 << 20),                          # slack
            32 * 1024 * 1024),
        int(vmem_cap * 0.75)))

    acc = pl.pallas_call(
        kernel,
        out_shape=jax.ShapeDtypeStruct((S, 1, Wp), jnp.float32),
        grid_spec=pltpu.PrefetchScalarGridSpec(
            num_scalar_prefetch=0,
            grid=(S, nblk, n_h),
            in_specs=[in_spec],
            out_specs=pl.BlockSpec((1, 1, Wp), lambda c, i, h: (c, 0, 0)),
        ),
        compiler_params=pltpu.CompilerParams(
            dimension_semantics=("parallel", "arbitrary", "arbitrary"),
            vmem_limit_bytes=vmem_limit),
    )(packed)

    total = jnp.sum(acc)                          # one tiny cross-lane reduce

    if n_h > 1:
        # Vertical diffs across H-tile boundaries (the in-kernel roll cannot see
        # the neighbouring tile): cheap strided-slice pass over 2*(n_h-1) rows.
        hi = packed[:, TH - 1:(n_h - 1) * TH:TH, :].astype(jnp.float32)
        lo = packed[:, TH:(n_h - 1) * TH + 1:TH, :].astype(jnp.float32)
        total = total + jnp.float32(y_scale) * jnp.sum(jnp.abs(lo - hi))

    return jnp.float32(loss_weight) * total


def _reference_tv_loss(pred, loss_weight=1.0, reduction='mean'):
    pred = pred.astype(jnp.float32)
    y = jnp.abs(pred[:, :, :-1, :] - pred[:, :, 1:, :])
    x = jnp.abs(pred[:, :, :, :-1] - pred[:, :, :, 1:])
    if reduction == 'mean':
        return loss_weight * (jnp.mean(x) + jnp.mean(y))
    return loss_weight * (jnp.sum(x) + jnp.sum(y))


if __name__ == "__main__":
    key = jax.random.PRNGKey(0)
    k1, k2, k3 = jax.random.split(key, 3)

    # 1) lane-packed small-W path (W=16 -> 8 planes per 128-lane vreg), 'mean'.
    pred = jax.random.normal(k1, (2, 4, 16, 16), dtype=jnp.float32)
    out = jax.block_until_ready(weighted_tv_loss(pred, loss_weight=1.0, reduction='mean'))
    ref = _reference_tv_loss(pred, loss_weight=1.0, reduction='mean')
    assert jnp.allclose(out, ref, rtol=5e-5, atol=1e-5), (out, ref)

    # 2) 'sum' reduction with a non-trivial loss_weight.
    out = jax.block_until_ready(weighted_tv_loss(pred, loss_weight=2.0, reduction='sum'))
    ref = _reference_tv_loss(pred, loss_weight=2.0, reduction='sum')
    assert jnp.allclose(out, ref, rtol=5e-5, atol=1e-2), (out, ref)

    # 3) forced H-tiling path with awkward sizes: packing padding (7 planes, k=5),
    #    H=43 (row padding to 48), 6 H-tiles with cross-tile boundary fix-up.
    pred3 = jax.random.normal(k2, (1, 7, 43, 24), dtype=jnp.float32)
    out = jax.block_until_ready(
        weighted_tv_loss(pred3, reduction='mean', max_block_bytes=4096))
    ref = _reference_tv_loss(pred3, reduction='mean')
    assert jnp.allclose(out, ref, rtol=5e-5, atol=1e-5), (out, ref)

    # 4) unpacked wide-W path (W=160 lane-padded to 256), 'sum'.
    pred4 = jax.random.normal(k3, (1, 2, 16, 160), dtype=jnp.float32)
    out = jax.block_until_ready(weighted_tv_loss(pred4, reduction='sum'))
    ref = _reference_tv_loss(pred4, reduction='sum')
    assert jnp.allclose(out, ref, rtol=5e-5, atol=1e-2), (out, ref)

    print("KERNEL_OK")
</pallas_src>

<mosaic_0001>
module attributes {stable_mosaic.version = 11 : i64} {
  func.func @_tv_kernel(%arg0: i32, %arg1: i32, %arg2: i32, %arg3: memref<1x16x128xf32, #tpu.memory_space<vmem>>, %arg4: memref<1x1x128xf32, #tpu.memory_space<vmem>>) attributes {dimension_semantics = [#tpu.dimension_semantics<parallel>, #tpu.dimension_semantics<arbitrary>, #tpu.dimension_semantics<arbitrary>], iteration_bounds = array<i64: 1, 1, 1>, scalar_prefetch = 0 : i64, scratch_operands = 0 : i64, tpu.core_type = #tpu.core_type<tc>, window_params = [{transform_indices = @transform_0, window_bounds = array<i64: 1, 16, 128>}, {transform_indices = @transform_1, window_bounds = array<i64: 1, 1, 128>}]} {
    %c0_i32 = arith.constant 0 : i32
    %0 = arith.cmpi eq, %arg1, %c0_i32 : i32
    %c0_i32_0 = arith.constant 0 : i32
    %1 = arith.cmpi eq, %arg2, %c0_i32_0 : i32
    %2 = arith.andi %0, %1 : i1
    %3 = arith.extui %2 : i1 to i32
    %c0_i32_1 = arith.constant 0 : i32
    %4 = arith.cmpi ne, %3, %c0_i32_1 : i32
    scf.if %4 {
      %cst_23 = arith.constant 0.000000e+00 : f32
      %50 = vector.broadcast %cst_23 : f32 to vector<1x1x128xf32>
      %c0_24 = arith.constant 0 : index
      %c0_25 = arith.constant 0 : index
      %c0_26 = arith.constant 0 : index
      %51 = vector.load %arg4[%c0_24, %c0_25, %c0_26] : memref<1x1x128xf32, #tpu.memory_space<vmem>>, vector<1x1x128xf32>
      tpu.vector_store %arg4[%c0_24, %c0_25, %c0_26], %50 {strides = array<i32>} : memref<1x1x128xf32, #tpu.memory_space<vmem>>, vector<1x1x128xf32>,
    } else {
    }
    %c0 = arith.constant 0 : index
    %c0_2 = arith.constant 0 : index
    %c0_3 = arith.constant 0 : index
    %5 = vector.load %arg3[%c0, %c0_2, %c0_3] : memref<1x16x128xf32, #tpu.memory_space<vmem>>, vector<1x16x128xf32>
    %6 = tpu.iota {dimensions = array<i32: 1>} : vector<1x16x128xi32>
    %c0_i32_4 = arith.constant 0 : i32
    %7 = vector.broadcast %c0_i32_4 : i32 to vector<1x16x128xi32>
    %8 = arith.cmpi sgt, %6, %7 : vector<1x16x128xi32>
    %c1_i32 = arith.constant 1 : i32
    %9 = tpu.dynamic_rotate %5 by %c1_i32 dim 1 : vector<1x16x128xf32>, i32 -> vector<1x16x128xf32>
    %10 = arith.subf %5, %9 : vector<1x16x128xf32>
    %11 = math.absf %10 : vector<1x16x128xf32>
    %cst = arith.constant 0.000000e+00 : f32
    %12 = vector.broadcast %cst : f32 to vector<1x16x128xf32>
    %13 = arith.select %8, %11, %12 : vector<1x16x128xi1>, vector<1x16x128xf32>
    %14 = tpu.iota {dimensions = array<i32: 2>} : vector<1x16x128xi32>
    %c16_i32 = arith.constant 16 : i32
    %c0_i32_5 = arith.constant 0 : i32
    %15 = arith.cmpi eq, %c16_i32, %c0_i32_5 : i32
    %c1_i32_6 = arith.constant 1 : i32
    %16 = arith.select %15, %c1_i32_6, %c16_i32 : i32
    %17 = vector.broadcast %16 : i32 to vector<1x16x128xi32>
    %18 = arith.remsi %14, %17 : vector<1x16x128xi32>
    %c0_i32_7 = arith.constant 0 : i32
    %19 = vector.broadcast %c0_i32_7 : i32 to vector<1x16x128xi32>
    %20 = arith.cmpi ne, %18, %19 : vector<1x16x128xi32>
    %c0_i32_8 = arith.constant 0 : i32
    %21 = vector.broadcast %c0_i32_8 : i32 to vector<1x16x128xi32>
    %22 = arith.cmpi slt, %18, %21 : vector<1x16x128xi32>
    %c0_i32_9 = arith.constant 0 : i32
    %23 = arith.cmpi slt, %16, %c0_i32_9 : i32
    %24 = vector.broadcast %23 : i1 to vector<1x16x128xi1>
    %25 = vector.broadcast %24 : vector<1x16x128xi1> to vector<1x16x128xi1>
    %26 = arith.xori %22, %25 : vector<1x16x128xi1>
    %27 = arith.andi %26, %20 : vector<1x16x128xi1>
    %28 = vector.broadcast %16 : i32 to vector<1x16x128xi32>
    %29 = arith.addi %18, %28 : vector<1x16x128xi32>
    %30 = arith.select %27, %29, %18 : vector<1x16x128xi1>, vector<1x16x128xi32>
    %c0_i32_10 = arith.constant 0 : i32
    %31 = vector.broadcast %c0_i32_10 : i32 to vector<1x16x128xi32>
    %32 = arith.cmpi ne, %30, %31 : vector<1x16x128xi32>
    %c1_i32_11 = arith.constant 1 : i32
    %33 = tpu.dynamic_rotate %5 by %c1_i32_11 dim 2 : vector<1x16x128xf32>, i32 -> vector<1x16x128xf32>
    %34 = arith.subf %5, %33 : vector<1x16x128xf32>
    %35 = math.absf %34 : vector<1x16x128xf32>
    %cst_12 = arith.constant 0.000000e+00 : f32
    %36 = vector.broadcast %cst_12 : f32 to vector<1x16x128xf32>
    %37 = arith.select %32, %35, %36 : vector<1x16x128xi1>, vector<1x16x128xf32>
    %cst_13 = arith.constant 5.2083336E-4 : f32
    %38 = vector.broadcast %cst_13 : f32 to vector<1x16x128xf32>
    %39 = arith.mulf %38, %13 : vector<1x16x128xf32>
    %cst_14 = arith.constant 5.2083336E-4 : f32
    %40 = vector.broadcast %cst_14 : f32 to vector<1x16x128xf32>
    %41 = arith.mulf %40, %37 : vector<1x16x128xf32>
    %42 = arith.addf %39, %41 : vector<1x16x128xf32>
    %cst_15 = arith.constant dense<0.000000e+00> : vector<16x128xf32>
    %43 = vector.multi_reduction <add>, %42, %cst_15 [0] : vector<1x16x128xf32> to vector<16x128xf32>
    %c0_16 = arith.constant 0 : index
    %c0_17 = arith.constant 0 : index
    %c0_18 = arith.constant 0 : index
    %44 = vector.load %arg4[%c0_16, %c0_17, %c0_18] : memref<1x1x128xf32, #tpu.memory_space<vmem>>, vector<1x1x128xf32>
    %cst_19 = arith.constant dense<0.000000e+00> : vector<128xf32>
    %45 = vector.multi_reduction <add>, %43, %cst_19 [0] : vector<16x128xf32> to vector<128xf32>
    %46 = vector.shape_cast %45 : vector<128xf32> to vector<1x128xf32>
    %47 = vector.shape_cast %46 : vector<1x128xf32> to vector<1x1x128xf32>
    %48 = arith.addf %44, %47 : vector<1x1x128xf32>
    %c0_20 = arith.constant 0 : index
    %c0_21 = arith.constant 0 : index
    %c0_22 = arith.constant 0 : index
    %49 = vector.load %arg4[%c0_20, %c0_21, %c0_22] : memref<1x1x128xf32, #tpu.memory_space<vmem>>, vector<1x1x128xf32>
    tpu.vector_store %arg4[%c0_20, %c0_21, %c0_22], %48 {strides = array<i32>} : memref<1x1x128xf32, #tpu.memory_space<vmem>>, vector<1x1x128xf32>,
    return
  }
  func.func @transform_0(%arg0: i32, %arg1: i32, %arg2: i32) -> (i32, i32, i32) {
    %c1_i32 = arith.constant 1 : i32
    %0 = arith.muli %arg0, %c1_i32 : i32
    %1 = arith.addi %0, %arg1 : i32
    %c0_i32 = arith.constant 0 : i32
    %c0_i32_0 = arith.constant 0 : i32
    return %1, %arg2, %c0_i32 : i32, i32, i32
  }
  func.func @transform_1(%arg0: i32, %arg1: i32, %arg2: i32) -> (i32, i32, i32) {
    %c0_i32 = arith.constant 0 : i32
    %c0_i32_0 = arith.constant 0 : i32
    %c0_i32_1 = arith.constant 0 : i32
    return %arg0, %c0_i32, %c0_i32_0 : i32, i32, i32
  }
}

</mosaic_0001>

<llo_original>
// kernel: tpu_custom_call.1
$region0: #{tpu_custom_call.1}
  #allocation0 [shape = 'u32[]', space=smem, size = 0x4, offset = 0x4, fixed_abs, tag = 'smem constant byte address 0x4 - core index']
  #allocation1 [shape = 'u32[144,128]{1,0:T(1,128)}', space=vmem, size = 0x12000, scoped, tag = 'internal scratch']
  %s0 = inlined_call_operand.hbm [shape: f32[1,16,128], index: 0, kind: input, shape index: {}]
  %s1 = inlined_call_operand.hbm [shape: f32[1,1,128], index: 1, kind: output, shape index: {}]
  %s2 = sld [smem:[#allocation0]]
  $region22: #{tpu_custom_call.1} parent=0
    _
  %s4 = ssub.s32 1, %s2
  %s5 = scalar_select 0, %s4, %s2
  $region1: #{tpu_custom_call.1} parent=0
    #allocation2 [shape = 'u8[8192]{0}', space=vmem, size = 0x2000, scoped, tag = 'input window, operand 0, single buffered']
    #allocation3 [shape = 's32[1]{0}', space=sflag, size = 0x4, scoped, tag = 'scoped memory for tpu_custom_call.1']
    #allocation4 [shape = 's32[1]{0}', space=sflag, size = 0x4, scoped, tag = 'scoped memory for tpu_custom_call.1']
    #allocation5 [shape = 'u8[512]{0}', space=vmem, size = 0x400, scoped, tag = 'output window, operand 0, single buffered']
    %6 = vsyncpa [#allocation3], 0
    %7 = vsyncpa [#allocation4], 0
    // Predicated region
    $region2: #{tpu_custom_call.1} parent=1 // pred_check
      _
    $region3: #{tpu_custom_call.1} parent=1 // pred_check_branch
      %9 = sbr.rel (0) target = $region5
    $region4: #{tpu_custom_call.1} parent=1 // pred_region
      %s10 = sadd.s32 0, 0
      %s12 = ssub.s32 256, 256
      %13 = vsyncadd [#allocation3], %s12
      %s14 = smul.addr %s10, 2
      %s15 = smul.addr %s14, 128
      %s16 = scalar_lea.hbm %s0, %s15
      %s17 = sshll.u32 [#allocation2], 4
      %s18 = int_to_ptr.vmem [resolvable:$true] %s17
      %23 = dma.hbm_to_vmem [thread:$0]  %s16, 256, %s18, [#allocation3], 128, 128, 8
    $region5: #{tpu_custom_call.1} parent=1 // pred_fallthru
      _
    // Predicated region
    $region6: #{tpu_custom_call.1} parent=1 // pred_check
      _
    $region7: #{tpu_custom_call.1} parent=1 // pred_check_branch
      %25 = sbr.rel (0) target = $region9
    $region8: #{tpu_custom_call.1} parent=1 // pred_region
      %26 = dma.done [#allocation3], 256
    $region9: #{tpu_custom_call.1} parent=1 // pred_fallthru
      _
    %s27 = sadd.s32 0, 0
    %p28 = scmp.eq.s32.totalorder 0, 0
    %p29 = scmp.eq.s32.totalorder 0, 0
    %p30 = pnand %p28, %p29
    %p31 = pneg %p30
    // Predicated region
    $region10: #{tpu_custom_call.1} parent=1 // pred_check
      _
    $region11: #{tpu_custom_call.1} parent=1 // pred_check_branch
      %33 = sbr.rel (%p30) target = $region13
    $region12: #{tpu_custom_call.1} parent=1 // pred_region
      %34 = vst [vmem:[#allocation5] sm:$0x1] 0.0
    $region13: #{tpu_custom_call.1} parent=1 // pred_fallthru
      _
    %v35 = vld [vmem:[#allocation2] sm:$0xff]
    %v36 = vld [vmem:[#allocation2 + $0x8] sm:$0xff]
    %v37 = vlaneseq
    %v38 = vshrl.u32 %v37, 7
    %v39 = vadd.s32 %v38, 8
    %vm40 = vcmp.gt.s32.totalorder %v38, 0
    %vm41 = vcmp.gt.s32.totalorder %v39, 0
    %v42 = vrot.slane %v35, 7
    %v43 = vrot.slane %v36, 7
    %vm44 = vcmp.lt.s32.totalorder %v38, 1
    %v45 = vsel %vm44, %v42, %v43
    %v46 = vsel %vm44, %v43, %v42
    %v47 = vsub.f32 %v35, %v46
    %v48 = vsub.f32 %v36, %v45
    %v49 = vand.u32 2147483647, %v47
    %v50 = vand.u32 2147483647, %v48
    %v51 = vsel %vm40, %v49, 0.0
    %v52 = vsel %vm41, %v50, 0.0
    %v53 = vlaneseq
    %v54 = vand.u32 %v53, 127
    %vm55 = vcmp.lt.s32.totalorder %v54, 0
    %v56 = vsub.s32 0, %v54
    %v57 = vsel %vm55, %v56, %v54
    %v58 = vshrl.u32 %v57, 4
    %v59 = vand.u32 %v57, 15
    %v60 = vsub.s32 0, %v59
    %v61 = vsel %vm55, %v60, %v59
    %vm62 = vcmp.ne.s32.totalorder %v61, 0
    %vm63 = vcmp.lt.s32.totalorder %v61, 0
    %vm64 = vmand %vm63, %vm62
    %v65 = vadd.s32 %v61, 16
    %v66 = vsel %vm64, %v65, %v61
    %vm67 = vcmp.ne.s32.totalorder %v66, 0
    %68 = vrot.lane.b32.xlu0 %v35, 1
    %v69 = vpop.permute.xlu0 %68
    %70 = vrot.lane.b32.xlu0 %v36, 1
    %v71 = vpop.permute.xlu0 %70
    %v72 = vsub.f32 %v35, %v69
    %v73 = vsub.f32 %v36, %v71
    %v74 = vand.u32 2147483647, %v72
    %v75 = vand.u32 2147483647, %v73
    %v76 = vsel %vm67, %v74, 0.0
    %v77 = vsel %vm67, %v75, 0.0
    %v78 = vmul.f32 %v51, 0.00052083336
    %v79 = vmul.f32 %v52, 0.00052083336
    %v80 = vmul.f32 %v76, 0.00052083336
    %v81 = vmul.f32 %v77, 0.00052083336
    %v82 = vadd.f32 %v78, %v80
    %v83 = vadd.f32 %v79, %v81
    %v84 = vadd.f32 %v82, 0.0
    %v85 = vadd.f32 %v83, 0.0
    %v86 = vld [vmem:[#allocation5] sm:$0x1]
    %v87 = vadd.f32 %v84, %v85
    %v88 = vrot.slane %v87, 4
    %v89 = vadd.f32 %v87, %v88
    %v90 = vrot.slane %v89, 2
    %v91 = vadd.f32 %v89, %v90
    %v92 = vrot.slane %v91, 1
    %v93 = vadd.f32 %v91, %v92
    %v94 = vadd.f32 %v86, %v93
    %95 = vst [vmem:[#allocation5] sm:$0x1] %v94
    // Predicated region
    $region14: #{tpu_custom_call.1} parent=1 // pred_check
      _
    $region15: #{tpu_custom_call.1} parent=1 // pred_check_branch
      %97 = sbr.rel (0) target = $region17
    $region16: #{tpu_custom_call.1} parent=1 // pred_region
      %s99 = ssub.s32 16, 16
      %100 = vsyncadd [#allocation4], %s99
      %s102 = sshll.u32 [#allocation5], 4
      %s103 = int_to_ptr.vmem [resolvable:$true] %s102
      %105 = dma.vmem_to_hbm [thread:$0]  %s103, 16, %s1, [#allocation4]
    $region17: #{tpu_custom_call.1} parent=1 // pred_fallthru
      _
    // Predicated region
    $region18: #{tpu_custom_call.1} parent=1 // pred_check
      _
    $region19: #{tpu_custom_call.1} parent=1 // pred_check_branch
      %107 = sbr.rel (0) target = $region21
    $region20: #{tpu_custom_call.1} parent=1 // pred_region
      %108 = dma.done [#allocation4], 16
    $region21: #{tpu_custom_call.1} parent=1 // pred_fallthru
      _
    %109 = vsyncpa [#allocation3], 1
    %110 = vsyncpa [#allocation4], 1

</llo_original>
